<compile_context>
chip_gen: v7x
topology: tpu7x:2x2x1
jax: 0.10.0
libtpu: 0.0.40
codegen_flags: <defaults>
</compile_context>

<pallas_src>
import math

import jax
import jax.numpy as jnp
from jax.experimental import pallas as pl
from jax.experimental.pallas import tpu as pltpu

_LANE = 128


def _round_up(x, m):
    return ((x + m - 1) // m) * m


def _tpu_config():
    """Per-generation scoped-VMEM limit; row-tile cap is 512 on every gen
    (worst case stage-4: A 2x4.7MB + B 4.7MB + out/res ~2MB ~= 16MB)."""
    try:
        vmem = pltpu.get_tpu_info().vmem_capacity_bytes
    except Exception:
        vmem = 64 * 1024 * 1024
    if vmem >= 96 * 1024 * 1024:        # v5e / v6e: 128 MiB physical VMEM
        return 512, 64 * 1024 * 1024
    return 512, 48 * 1024 * 1024        # v7x: 64 MiB physical VMEM


_TM_MAX, _VMEM_LIMIT = _tpu_config()

# ------------- feature probe: single-buffered constant blocks ---------------

_BUFFERED1_OK = None


def _buffered1_supported():
    """True if pl.BlockSpec(..., pipeline_mode=pl.Buffered(1)) lowers."""
    global _BUFFERED1_OK
    if _BUFFERED1_OK is None:
        def _probe_kernel(x_ref, o_ref):
            o_ref[...] = x_ref[...] + 1.0
        try:
            f = pl.pallas_call(
                _probe_kernel,
                out_shape=jax.ShapeDtypeStruct((16, 128), jnp.float32),
                grid=(2,),
                in_specs=[pl.BlockSpec((8, 128), lambda i: (0, 0),
                                       pipeline_mode=pl.Buffered(1))],
                out_specs=pl.BlockSpec((8, 128), lambda i: (i, 0)),
            )
            jax.block_until_ready(f(jnp.zeros((8, 128), jnp.float32)))
            _BUFFERED1_OK = True
        except Exception:
            _BUFFERED1_OK = False
    return _BUFFERED1_OK


# ----------------------------- Pallas kernels ------------------------------

def _make_gemm_kernel(relu, has_res):
    """Fused:  out = maybe_relu((A @ B) * scale + bias [+ residual]).

    A/B are bf16 (MXU), accumulation + epilogue in f32, output cast to o_ref dtype.
    """
    if has_res:
        def kernel(a_ref, b_ref, s_ref, c_ref, r_ref, o_ref):
            acc = jnp.dot(a_ref[...], b_ref[...], preferred_element_type=jnp.float32)
            acc = acc * s_ref[...] + c_ref[...] + r_ref[...].astype(jnp.float32)
            if relu:
                acc = jnp.maximum(acc, 0.0)
            o_ref[...] = acc.astype(o_ref.dtype)
    else:
        def kernel(a_ref, b_ref, s_ref, c_ref, o_ref):
            acc = jnp.dot(a_ref[...], b_ref[...], preferred_element_type=jnp.float32)
            acc = acc * s_ref[...] + c_ref[...]
            if relu:
                acc = jnp.maximum(acc, 0.0)
            o_ref[...] = acc.astype(o_ref.dtype)
    return kernel


def _maxpool_kernel(p_ref, o_ref):
    # p_ref: (9, tr, C); reduce over the leading (non-tiled) window axis -> VPU max.
    o_ref[...] = jnp.max(p_ref[...], axis=0)


def _make_avg_head_kernel(inv_hw):
    # Global average pool fused with the (512 -> 128-padded) head GEMM.
    def kernel(x_ref, b_ref, s_ref, c_ref, o_ref):
        feat = jnp.sum(x_ref[...].astype(jnp.float32), axis=1) * inv_hw   # (N, C)
        acc = jnp.dot(feat.astype(jnp.bfloat16), b_ref[...],
                      preferred_element_type=jnp.float32)
        o_ref[...] = acc * s_ref[...] + c_ref[...]
    return kernel


# ------------------------------- GEMM wrapper --------------------------------

def _choose_tile(M):
    """Pick (tm, Mpad). Always >= 2 grid steps when M > 8 (v7x megacore)."""
    m8 = _round_up(max(M, 1), 8)
    if m8 <= 8:
        return 8, 8
    if m8 <= 2 * _TM_MAX:
        tm = _round_up(m8 // 2, 8)
        return tm, _round_up(M, tm)
    return _TM_MAX, _round_up(M, _TM_MAX)


def fused_gemm(a, b, scale, bias, residual=None, relu=False, out_dtype=jnp.bfloat16):
    """a:(M,K) b:(Kp,N) (Kp>=K, Kp%128==0) scale/bias:(1,N) f32 -> (M,N) out_dtype."""
    M, K = a.shape
    Kb, N = b.shape
    assert Kb >= K and Kb % 128 == 0, (K, Kb)
    a = a.astype(jnp.bfloat16)
    b = b.astype(jnp.bfloat16)
    if residual is not None:
        residual = residual.astype(jnp.bfloat16)

    tm, Mpad = _choose_tile(M)
    if Mpad != M or Kb != K:
        a = jnp.pad(a, ((0, Mpad - M), (0, Kb - K)))     # one fused M-pad + K-pad
    if residual is not None and Mpad != M:
        residual = jnp.pad(residual, ((0, Mpad - M), (0, 0)))
    K = Kb
    rows = Mpad // tm

    kernel = _make_gemm_kernel(relu, residual is not None)
    const_kw = ({'pipeline_mode': pl.Buffered(1)}
                if _buffered1_supported() else {})

    if rows == 1 and N % 256 == 0:
        # Tiny-M layer (stage 3/4 at small images): split the output columns so
        # the parallel grid axis has 2 steps (feeds both v7x TensorCores).
        tn = N // 2
        grid = (2,)
        in_specs = [
            pl.BlockSpec((tm, K), lambda j: (0, 0), **const_kw),   # A constant
            pl.BlockSpec((K, tn), lambda j: (0, j)),
            pl.BlockSpec((1, tn), lambda j: (0, j)),
            pl.BlockSpec((1, tn), lambda j: (0, j)),
        ]
        args = [a, b, scale, bias]
        if residual is not None:
            in_specs.append(pl.BlockSpec((tm, tn), lambda j: (0, j)))
            args.append(residual)
        out_specs = pl.BlockSpec((tm, tn), lambda j: (0, j))
    else:
        grid = (rows,)
        in_specs = [
            pl.BlockSpec((tm, K), lambda i: (i, 0)),               # A tiles over rows
            pl.BlockSpec((K, N), lambda i: (0, 0), **const_kw),    # whole B, single buf
            pl.BlockSpec((1, N), lambda i: (0, 0), **const_kw),    # folded BN scale
            pl.BlockSpec((1, N), lambda i: (0, 0), **const_kw),    # folded BN bias
        ]
        args = [a, b, scale, bias]
        if residual is not None:
            in_specs.append(pl.BlockSpec((tm, N), lambda i: (i, 0)))
            args.append(residual)
        out_specs = pl.BlockSpec((tm, N), lambda i: (i, 0))

    out = pl.pallas_call(
        kernel,
        out_shape=jax.ShapeDtypeStruct((Mpad, N), out_dtype),
        grid=grid,
        in_specs=in_specs,
        out_specs=out_specs,
        compiler_params=pltpu.CompilerParams(
            dimension_semantics=("parallel",),
            vmem_limit_bytes=_VMEM_LIMIT,
        ),
    )(*args)
    return out[:M]


# ------------------------------- JAX glue ----------------------------------

def _im2col(x, k, stride, pad):
    """x: (N,H,W,C) -> patches (N,Hout,Wout,k*k,C).  TODO(synk): in-kernel im2col."""
    N, H, W, C = x.shape
    xp = jnp.pad(x, ((0, 0), (pad, pad), (pad, pad), (0, 0)))
    Hout = (H + 2 * pad - k) // stride + 1
    Wout = (W + 2 * pad - k) // stride + 1
    cols = [xp[:, dy:dy + Hout * stride:stride, dx:dx + Wout * stride:stride, :]
            for dy in range(k) for dx in range(k)]
    patches = jnp.stack(cols, axis=3)
    return patches, Hout, Wout


def conv_bn(x, w_mat, bn_p, k, stride, pad, relu, residual=None,
            out_dtype=jnp.bfloat16):
    """Conv(kxk, stride, pad, bias=False) + folded BN [+ residual] [+ ReLU]."""
    N, H, W, Cin = x.shape
    patches, Hout, Wout = _im2col(x, k, stride, pad)
    a = patches.reshape(N * Hout * Wout, k * k * Cin)
    res2d = None
    if residual is not None:
        res2d = residual.reshape(N * Hout * Wout, -1)
    scale, bias = bn_p
    out = fused_gemm(a, w_mat, scale, bias, residual=res2d, relu=relu,
                     out_dtype=out_dtype)
    return out.reshape(N, Hout, Wout, w_mat.shape[1])


def maxpool_3x3_s2(x):
    """3x3/stride-2/pad-1 max pool; window axis leading, 128-lane channels."""
    N, H, W, C = x.shape
    fill = -3e38                      # large finite negative (post-ReLU inputs >= 0)
    xp = jnp.pad(x, ((0, 0), (1, 1), (1, 1), (0, 0)), constant_values=fill)
    Hout = (H - 1) // 2 + 1
    Wout = (W - 1) // 2 + 1
    cols = [xp[:, dy:dy + Hout * 2:2, dx:dx + Wout * 2:2, :]
            for dy in range(3) for dx in range(3)]
    p = jnp.stack(cols, axis=0).reshape(9, N * Hout * Wout, C)
    M = N * Hout * Wout
    tr, Mpad = _choose_tile(M)
    if Mpad != M:
        p = jnp.pad(p, ((0, 0), (0, Mpad - M), (0, 0)))
    out = pl.pallas_call(
        _maxpool_kernel,
        out_shape=jax.ShapeDtypeStruct((Mpad, C), x.dtype),
        grid=(Mpad // tr,),
        in_specs=[pl.BlockSpec((9, tr, C), lambda i: (0, i, 0))],
        out_specs=pl.BlockSpec((tr, C), lambda i: (i, 0)),
        compiler_params=pltpu.CompilerParams(
            dimension_semantics=("parallel",),
            vmem_limit_bytes=_VMEM_LIMIT,
        ),
    )(p)
    return out[:M].reshape(N, Hout, Wout, C)


def avgpool_head(x, head_wT, head_scale, head_b):
    """Global average pool fused with the padded [color|number] head GEMM."""
    N, H, W, C = x.shape
    HW = H * W
    xr = x.reshape(N, HW, C).astype(jnp.bfloat16)
    Nout = head_wT.shape[1]
    return pl.pallas_call(
        _make_avg_head_kernel(1.0 / float(HW)),
        out_shape=jax.ShapeDtypeStruct((N, Nout), jnp.float32),
        grid=(1,),
        in_specs=[pl.BlockSpec((N, HW, C), lambda i: (0, 0, 0)),
                  pl.BlockSpec((C, Nout), lambda i: (0, 0)),
                  pl.BlockSpec((1, Nout), lambda i: (0, 0)),
                  pl.BlockSpec((1, Nout), lambda i: (0, 0))],
        out_specs=pl.BlockSpec((N, Nout), lambda i: (0, 0)),
        compiler_params=pltpu.CompilerParams(
            dimension_semantics=("arbitrary",),
            vmem_limit_bytes=_VMEM_LIMIT,
        ),
    )(xr, head_wT, head_scale, head_b)


def basic_block(x, blk):
    identity = x
    out = conv_bn(x, blk['conv1_w'], blk['bn1'], 3, blk['stride'], 1, relu=True)
    if 'down_w' in blk:
        identity = conv_bn(x, blk['down_w'], blk['down_bn'], 1, blk['stride'], 0,
                           relu=False)
    # conv2 + BN + residual add + ReLU, all fused into one Pallas GEMM kernel
    out = conv_bn(out, blk['conv2_w'], blk['bn2'], 3, 1, 1, relu=True,
                  residual=identity)
    return out


def resnet34_forward(x_nchw, params):
    # NCHW -> NHWC; activations carried in bf16 (stage 1 carried as 128 lanes),
    # f32 accumulation inside kernels.
    x = jnp.transpose(x_nchw, (0, 2, 3, 1)).astype(jnp.bfloat16)
    x = conv_bn(x, params['conv1_w'], params['bn1'], 7, 2, 3, relu=True)
    x = maxpool_3x3_s2(x)
    for stage in params['stages']:
        for blk in stage:
            x = basic_block(x, blk)
    # model.fc = Identity; avg-pool + both classifier heads fused in one kernel.
    heads = avgpool_head(x, params['head_wT'], params['head_scale'], params['head_b'])
    color = heads[:, :4]
    number = heads[:, 4:14]
    return color, number


# --------------------------- parameter creation -----------------------------

def init_params(seed=0):
    base = jax.random.PRNGKey(seed)
    ctr = [0]

    def nk():
        ctr[0] += 1
        return jax.random.fold_in(base, ctr[0])

    def carry(c):
        return max(c, _LANE)            # pad 64-channel layers to 128 lanes

    def conv_w(cout, cin, k, cin_carry=None, cout_carry=None):
        cin_carry = cin if cin_carry is None else cin_carry
        cout_carry = cout if cout_carry is None else cout_carry
        w = jax.random.normal(nk(), (cout, cin, k, k), jnp.float32)
        w = w * math.sqrt(2.0 / (cin * k * k))
        # (Cout,Cin,kh,kw) -> (kh,kw,Cin,Cout); zero-pad carried channels; flatten
        # to (kh*kw*Cin_carry, Cout_carry) matching im2col patch ordering.
        wm = jnp.transpose(w, (2, 3, 1, 0))
        wm = jnp.pad(wm, ((0, 0), (0, 0),
                          (0, cin_carry - cin), (0, cout_carry - cout)))
        wm = wm.reshape(k * k * cin_carry, cout_carry)
        K = k * k * cin_carry
        Kp = _round_up(K, 128)
        if Kp != K:                     # only conv1 (K = 7*7*3 = 147) needs this
            wm = jnp.pad(wm, ((0, Kp - K), (0, 0)))
        return wm.astype(jnp.bfloat16)  # bf16 weights for the MXU

    def bn(c, c_carry=None, eps=1e-5):
        # TODO(synk): BatchNorm is applied in inference mode (folded running
        # stats); training-mode batch statistics are not reproduced.
        c_carry = c if c_carry is None else c_carry
        gamma = 1.0 + 0.1 * jax.random.normal(nk(), (c,), jnp.float32)
        beta = 0.1 * jax.random.normal(nk(), (c,), jnp.float32)
        mean = 0.1 * jax.random.normal(nk(), (c,), jnp.float32)
        var = 1.0 + 0.1 * jnp.abs(jax.random.normal(nk(), (c,), jnp.float32))
        scale = gamma / jnp.sqrt(var + eps)
        bias = beta - mean * scale
        scale = jnp.pad(scale, (0, c_carry - c), constant_values=1.0)
        bias = jnp.pad(bias, (0, c_carry - c))
        return scale.reshape(1, c_carry), bias.reshape(1, c_carry)

    params = {'conv1_w': conv_w(64, 3, 7, cout_carry=carry(64)),
              'bn1': bn(64, carry(64))}

    stages = []
    in_c = 64
    # torchvision resnet34: layers [3, 4, 6, 3], channels [64, 128, 256, 512]
    for (out_c, nblocks, stride) in [(64, 3, 1), (128, 4, 2), (256, 6, 2), (512, 3, 2)]:
        blocks = []
        for bi in range(nblocks):
            s = stride if bi == 0 else 1
            in_cc, out_cc = carry(in_c), carry(out_c)
            blk = {
                'conv1_w': conv_w(out_c, in_c, 3, in_cc, out_cc),
                'bn1': bn(out_c, out_cc),
                'conv2_w': conv_w(out_c, out_c, 3, out_cc, out_cc),
                'bn2': bn(out_c, out_cc),
                'stride': s,
            }
            if s != 1 or in_c != out_c:
                blk['down_w'] = conv_w(out_c, in_c, 1, in_cc, out_cc)
                blk['down_bn'] = bn(out_c, out_cc)
            blocks.append(blk)
            in_c = out_c
        stages.append(blocks)
    params['stages'] = stages

    # TODO(synk): pretrained=True torchvision weights are not reproduced; random init.
    bound = 1.0 / math.sqrt(512.0)
    cw = jax.random.uniform(nk(), (4, 512), jnp.float32, -bound, bound)
    cb = jax.random.uniform(nk(), (4,), jnp.float32, -bound, bound)
    nw = jax.random.uniform(nk(), (10, 512), jnp.float32, -bound, bound)
    nb = jax.random.uniform(nk(), (10,), jnp.float32, -bound, bound)
    # Fuse both heads into one (512, 14) GEMM, padded to 128 output lanes.
    head_w = jnp.concatenate([cw, nw], axis=0).T          # (512, 14)
    head_b = jnp.concatenate([cb, nb], axis=0).reshape(1, 14)
    params['head_wT'] = jnp.pad(head_w, ((0, 0), (0, _LANE - 14))).astype(jnp.bfloat16)
    params['head_b'] = jnp.pad(head_b, ((0, 0), (0, _LANE - 14)))
    params['head_scale'] = jnp.ones((1, _LANE), jnp.float32)
    return params


# ---------------------------------- main ------------------------------------

if __name__ == "__main__":
    params = init_params(seed=0)
    x = jax.random.normal(jax.random.PRNGKey(0), (2, 3, 32, 32), jnp.float32)
    color, number = resnet34_forward(x, params)
    jax.block_until_ready((color, number))
    assert color.shape == (2, 4), color.shape
    assert number.shape == (2, 10), number.shape
    assert color.dtype == jnp.float32 and number.dtype == jnp.float32
    print("KERNEL_OK")
</pallas_src>

<mosaic_0001>
module attributes {stable_mosaic.version = 11 : i64} {
  func.func @_probe_kernel(%arg0: i32, %arg1: memref<8x128xf32, #tpu.memory_space<vmem>>, %arg2: memref<8x128xf32, #tpu.memory_space<vmem>>) attributes {dimension_semantics = [#tpu.dimension_semantics<arbitrary>], iteration_bounds = array<i64: 2>, scalar_prefetch = 0 : i64, scratch_operands = 0 : i64, tpu.core_type = #tpu.core_type<tc>, window_params = [{pipeline_mode = #tpu.pipeline_mode<synchronous>, transform_indices = @transform_0, window_bounds = array<i64: 8, 128>}, {transform_indices = @transform_1, window_bounds = array<i64: 8, 128>}]} {
    %c0 = arith.constant 0 : index
    %c0_0 = arith.constant 0 : index
    %0 = vector.load %arg1[%c0, %c0_0] : memref<8x128xf32, #tpu.memory_space<vmem>>, vector<8x128xf32>
    %cst = arith.constant 1.000000e+00 : f32
    %1 = vector.broadcast %cst : f32 to vector<8x128xf32>
    %2 = arith.addf %0, %1 : vector<8x128xf32>
    %c0_1 = arith.constant 0 : index
    %c0_2 = arith.constant 0 : index
    %3 = vector.load %arg2[%c0_1, %c0_2] : memref<8x128xf32, #tpu.memory_space<vmem>>, vector<8x128xf32>
    tpu.vector_store %arg2[%c0_1, %c0_2], %2 {strides = array<i32>} : memref<8x128xf32, #tpu.memory_space<vmem>>, vector<8x128xf32>,
    return
  }
  func.func @transform_0(%arg0: i32) -> (i32, i32) {
    %c0_i32 = arith.constant 0 : i32
    %c0_i32_0 = arith.constant 0 : i32
    %c0_i32_1 = arith.constant 0 : i32
    return %c0_i32, %c0_i32_0 : i32, i32
  }
  func.func @transform_1(%arg0: i32) -> (i32, i32) {
    %c0_i32 = arith.constant 0 : i32
    %c0_i32_0 = arith.constant 0 : i32
    return %arg0, %c0_i32 : i32, i32
  }
}

module attributes {stable_mosaic.version = 11 : i64} {
  func.func @kernel(%arg0: i32, %arg1: memref<256x256xbf16, #tpu.memory_space<vmem>>, %arg2: memref<256x128xbf16, #tpu.memory_space<vmem>>, %arg3: memref<1x128xf32, #tpu.memory_space<vmem>>, %arg4: memref<1x128xf32, #tpu.memory_space<vmem>>, %arg5: memref<256x128xbf16, #tpu.memory_space<vmem>>) attributes {dimension_semantics = [#tpu.dimension_semantics<parallel>], iteration_bounds = array<i64: 2>, scalar_prefetch = 0 : i64, scratch_operands = 0 : i64, tpu.core_type = #tpu.core_type<tc>, window_params = [{transform_indices = @transform_0, window_bounds = array<i64: 256, 256>}, {pipeline_mode = #tpu.pipeline_mode<synchronous>, transform_indices = @transform_1, window_bounds = array<i64: 256, 128>}, {pipeline_mode = #tpu.pipeline_mode<synchronous>, transform_indices = @transform_2, window_bounds = array<i64: 1, 128>}, {pipeline_mode = #tpu.pipeline_mode<synchronous>, transform_indices = @transform_3, window_bounds = array<i64: 1, 128>}, {transform_indices = @transform_4, window_bounds = array<i64: 256, 128>}]} {
    %c0 = arith.constant 0 : index
    %c0_0 = arith.constant 0 : index
    %0 = vector.load %arg1[%c0, %c0_0] : memref<256x256xbf16, #tpu.memory_space<vmem>>, vector<256x256xbf16>
    %c0_1 = arith.constant 0 : index
    %c0_2 = arith.constant 0 : index
    %1 = vector.load %arg2[%c0_1, %c0_2] : memref<256x128xbf16, #tpu.memory_space<vmem>>, vector<256x128xbf16>
    %cst = arith.constant dense<0.000000e+00> : vector<256x128xf32>
    %2 = tpu.matmul %0, %1, %cst {dimension_numbers = #tpu.dot_dimension_numbers<[1], [0], [0], [1], [0, 0, 1, 1], [], []>} : vector<256x256xbf16>, vector<256x128xbf16>, vector<256x128xf32> -> vector<256x128xf32>
    %c0_3 = arith.constant 0 : index
    %c0_4 = arith.constant 0 : index
    %3 = vector.load %arg3[%c0_3, %c0_4] : memref<1x128xf32, #tpu.memory_space<vmem>>, vector<1x128xf32>
    %4 = vector.broadcast %3 : vector<1x128xf32> to vector<256x128xf32>
    %5 = arith.mulf %2, %4 : vector<256x128xf32>
    %c0_5 = arith.constant 0 : index
    %c0_6 = arith.constant 0 : index
    %6 = vector.load %arg4[%c0_5, %c0_6] : memref<1x128xf32, #tpu.memory_space<vmem>>, vector<1x128xf32>
    %7 = vector.broadcast %6 : vector<1x128xf32> to vector<256x128xf32>
    %8 = arith.addf %5, %7 : vector<256x128xf32>
    %cst_7 = arith.constant 0.000000e+00 : f32
    %9 = vector.broadcast %cst_7 : f32 to vector<256x128xf32>
    %10 = arith.maximumf %8, %9 : vector<256x128xf32>
    %11 = arith.truncf %10 : vector<256x128xf32> to vector<256x128xbf16>
    %c0_8 = arith.constant 0 : index
    %c0_9 = arith.constant 0 : index
    %12 = vector.load %arg5[%c0_8, %c0_9] : memref<256x128xbf16, #tpu.memory_space<vmem>>, vector<256x128xbf16>
    tpu.vector_store %arg5[%c0_8, %c0_9], %11 {strides = array<i32>} : memref<256x128xbf16, #tpu.memory_space<vmem>>, vector<256x128xbf16>,
    return
  }
  func.func @transform_0(%arg0: i32) -> (i32, i32) {
    %c0_i32 = arith.constant 0 : i32
    %c0_i32_0 = arith.constant 0 : i32
    return %arg0, %c0_i32 : i32, i32
  }
  func.func @transform_1(%arg0: i32) -> (i32, i32) {
    %c0_i32 = arith.constant 0 : i32
    %c0_i32_0 = arith.constant 0 : i32
    %c0_i32_1 = arith.constant 0 : i32
    return %c0_i32, %c0_i32_0 : i32, i32
  }
  func.func @transform_2(%arg0: i32) -> (i32, i32) {
    %c0_i32 = arith.constant 0 : i32
    %c0_i32_0 = arith.constant 0 : i32
    %c0_i32_1 = arith.constant 0 : i32
    return %c0_i32, %c0_i32_0 : i32, i32
  }
  func.func @transform_3(%arg0: i32) -> (i32, i32) {
    %c0_i32 = arith.constant 0 : i32
    %c0_i32_0 = arith.constant 0 : i32
    %c0_i32_1 = arith.constant 0 : i32
    return %c0_i32, %c0_i32_0 : i32, i32
  }
  func.func @transform_4(%arg0: i32) -> (i32, i32) {
    %c0_i32 = arith.constant 0 : i32
    %c0_i32_0 = arith.constant 0 : i32
    return %arg0, %c0_i32 : i32, i32
  }
}

</mosaic_0001>

<llo_original>
// kernel: tpu_custom_call.1
$region0: #{tpu_custom_call.1}
  #allocation0 [shape = 'u32[]', space=smem, size = 0x4, offset = 0x4, fixed_abs, tag = 'smem constant byte address 0x4 - core index']
  #allocation1 [shape = 'u32[144,128]{1,0:T(1,128)}', space=vmem, size = 0x12000, scoped, tag = 'internal scratch']
  %s0 = inlined_call_operand.hbm [shape: f32[8,128], index: 0, kind: input, shape index: {}]
  %s1 = inlined_call_operand.hbm [shape: f32[16,128], index: 1, kind: output, shape index: {}]
  %s2 = sld [smem:[#allocation0]]
  $region41: #{tpu_custom_call.1} parent=0
    _
  %s4 = ssub.s32 1, %s2
  %s5 = scalar_select 0, %s4, %s2
  $region1: #{tpu_custom_call.1} parent=0
    #allocation2 [shape = 'u8[4096]{0}', space=vmem, size = 0x1000, scoped, tag = 'input window, operand 0, single buffered']
    #allocation3 [shape = 's32[2]{0}', space=sflag, size = 0x8, scoped, tag = 'scoped memory for tpu_custom_call.1']
    #allocation4 [shape = 's32[2]{0}', space=sflag, size = 0x8, scoped, tag = 'scoped memory for tpu_custom_call.1']
    #allocation5 [shape = 'u8[8192]{0}', space=vmem, size = 0x2000, scoped, tag = 'output window, operand 0']
    %6 = vsyncpa [#allocation3], 0
    %7 = vsyncpa [#allocation4], 0
    %s8 = scalar_lea.sflag [#allocation4], 1
    %9 = vsyncpa %s8, 0
    loop: start=0, step=1, limit=4
    $region2: #{tpu_custom_call.1} parent=1 // loop_pre_header
      _
    $region3: #{tpu_custom_call.1} parent=1 // loop_header
      %s11 = sphi 0, %s15
      %p12 = scmp.ge.s32.totalorder %s11, 4
      %s19 = sphi 0, %s19
      %s21 = sphi 0, %s19
      %s22 = sphi 0, %s21
      %s36 = sphi 0, %s22
      %s42 = sphi 0, %s44
      %s45 = sphi 0, %s42
      %s46 = sphi 0, %s45
      %s62 = sphi 0, %s46
    $region4: #{tpu_custom_call.1} parent=1 // loop_header_branch
      %14 = sbr.rel (%p12) target = $region8
    $region5: #{tpu_custom_call.1} parent=1 // loop_body
      %s16 = ssub.s32 %s11, 1
      %s17 = ssub.s32 %s11, 2
      %s18 = sadd.s32 %s11, 1
      %s20 = sadd.s32 %s19, 1
      %p23 = scmp.eq.s32.totalorder %s11, 1
      %p24 = scmp.ne.s32.totalorder %s19, %s21
      %p25 = scmp.eq.s32.totalorder %s11, 0
      %p26 = por %p24, %p25
      %p27 = scmp.ne.s32.totalorder %s19, %s21
      %p28 = scmp.eq.s32.totalorder %s16, 1
      %p29 = por %p27, %p28
      %p30 = scmp.ne.s32.totalorder %s21, %s22
      %p31 = scmp.eq.s32.totalorder %s16, 0
      %p32 = por %p30, %p31
      %p33 = scmp.ne.s32.totalorder %s21, %s22
      %p34 = scmp.eq.s32.totalorder %s17, 1
      %p35 = por %p33, %p34
      %p37 = scmp.ne.s32.totalorder %s22, %s36
      %p38 = scmp.eq.s32.totalorder %s17, 0
      %p39 = por %p37, %p38
      %s40 = ssub.s32 %s11, %s18
      %p41 = scmp.eq.s32.totalorder %s40, 0
      %s43 = sadd.s32 %s42, 1
      %s44 = scalar_select %p41, %s42, %s43
      %p47 = pneg %p41
      %p48 = scmp.eq.s32.totalorder %s11, 1
      %p49 = por %p47, %p48
      %p50 = scmp.ne.s32.totalorder %s42, %s45
      %p51 = scmp.eq.s32.totalorder %s11, 0
      %p52 = por %p50, %p51
      %p53 = scmp.ne.s32.totalorder %s42, %s45
      %p54 = scmp.eq.s32.totalorder %s16, 1
      %p55 = por %p53, %p54
      %p56 = scmp.ne.s32.totalorder %s45, %s46
      %p57 = scmp.eq.s32.totalorder %s16, 0
      %p58 = por %p56, %p57
      %p59 = scmp.ne.s32.totalorder %s45, %s46
      %p60 = scmp.eq.s32.totalorder %s17, 1
      %p61 = por %p59, %p60
      %p63 = scmp.ne.s32.totalorder %s46, %s62
      %p64 = scmp.eq.s32.totalorder %s17, 0
      %p65 = por %p63, %p64
      %p66 = scmp.le.s32.totalorder 1, %s11
      %p67 = scmp.lt.s32.totalorder %s11, 3
      %p68 = pnand %p66, %p67
      %p69 = pneg %p68
      // Predicated region
      $region9: #{tpu_custom_call.1} parent=5 // pred_check
        _
      $region10: #{tpu_custom_call.1} parent=5 // pred_check_branch
        %71 = sbr.rel (%p68) target = $region12
      $region11: #{tpu_custom_call.1} parent=5 // pred_region
        %s72 = ssub.s32 %s11, 1
        // Predicated region
        $region13: #{tpu_custom_call.1} parent=11 // pred_check
          %p73 = pneg %p32
        $region14: #{tpu_custom_call.1} parent=11 // pred_check_branch
          %75 = sbr.rel (%p73) target = $region16
        $region15: #{tpu_custom_call.1} parent=11 // pred_region
          %s77 = ssub.s32 128, 128
          %78 = vsyncadd [#allocation3], %s77
          %s80 = sshll.u32 [#allocation2], 4
          %s81 = int_to_ptr.vmem [resolvable:$true] %s80
          %83 = dma.hbm_to_vmem [thread:$0]  %s0, 128, %s81, [#allocation3]
        $region16: #{tpu_custom_call.1} parent=11 // pred_fallthru
          _
      $region12: #{tpu_custom_call.1} parent=5 // pred_fallthru
        _
      %p84 = scmp.lt.s32.totalorder %s11, 2
      // Predicated region
      $region17: #{tpu_custom_call.1} parent=5 // pred_check
        %p85 = pneg %p84
      $region18: #{tpu_custom_call.1} parent=5 // pred_check_branch
        %87 = sbr.rel (%p85) target = $region20
      $region19: #{tpu_custom_call.1} parent=5 // pred_region
        _
      $region20: #{tpu_custom_call.1} parent=5 // pred_fallthru
        _
      %p88 = scmp.le.s32.totalorder 1, %s11
      %p89 = scmp.lt.s32.totalorder %s11, 3
      %p90 = pnand %p88, %p89
      %p91 = pneg %p90
      // Predicated region
      $region21: #{tpu_custom_call.1} parent=5 // pred_check
        _
      $region22: #{tpu_custom_call.1} parent=5 // pred_check_branch
        %93 = sbr.rel (%p90) target = $region24
      $region23: #{tpu_custom_call.1} parent=5 // pred_region
        %s94 = ssub.s32 %s11, 1
        // Predicated region
        $region25: #{tpu_custom_call.1} parent=23 // pred_check
          %p95 = pneg %p32
        $region26: #{tpu_custom_call.1} parent=23 // pred_check_branch
          %97 = sbr.rel (%p95) target = $region28
        $region27: #{tpu_custom_call.1} parent=23 // pred_region
          %98 = dma.done [#allocation3], 128
        $region28: #{tpu_custom_call.1} parent=23 // pred_fallthru
          _
        %p99 = pneg %p32
        %p100 = pneg %p29
        %p101 = pneg %p58
        %p102 = pneg %p55
        %s103 = sand.u32 %s45, 1
        %s104 = scalar_lea.sflag [#allocation4], %s103
        %s105 = sand.u32 %s45, 1
        %s106 = smul.addr %s105, 8
        %s107 = scalar_lea.vmem [#allocation5], %s106
        %v108 = vld [vmem:[#allocation2] sm:$0xff]
        %v109 = vadd.f32 %v108, 1.0
        %110 = vst [vmem:[%s107] sm:$0xff] %v109
        %s111 = sand.u32 %s45, 1
        %s112 = scalar_lea.sflag [#allocation4], %s111
        %s113 = sand.u32 %s45, 1
        %s114 = smul.addr %s113, 8
        %s115 = scalar_lea.vmem [#allocation5], %s114
        // Predicated region
        $region29: #{tpu_custom_call.1} parent=23 // pred_check
          %p116 = pneg %p55
        $region30: #{tpu_custom_call.1} parent=23 // pred_check_branch
          %118 = sbr.rel (%p116) target = $region32
        $region31: #{tpu_custom_call.1} parent=23 // pred_region
          %s120 = ssub.s32 128, 128
          %121 = vsyncadd %s112, %s120
          %s122 = smul.addr %s16, 128
          %s123 = scalar_lea.hbm %s1, %s122
          %s125 = sshll.u32 %s115, 4
          %s126 = int_to_ptr.vmem [resolvable:$true] %s125
          %128 = dma.vmem_to_hbm [thread:$0]  %s126, 128, %s123, %s112
        $region32: #{tpu_custom_call.1} parent=23 // pred_fallthru
          _
      $region24: #{tpu_custom_call.1} parent=5 // pred_fallthru
        _
      %p129 = scmp.le.s32.totalorder 2, %s11
      // Predicated region
      $region33: #{tpu_custom_call.1} parent=5 // pred_check
        %p130 = pneg %p129
      $region34: #{tpu_custom_call.1} parent=5 // pred_check_branch
        %132 = sbr.rel (%p130) target = $region36
      $region35: #{tpu_custom_call.1} parent=5 // pred_region
        %s133 = ssub.s32 %s11, 2
        // Predicated region
        $region37: #{tpu_custom_call.1} parent=35 // pred_check
          %p134 = pneg %p61
        $region38: #{tpu_custom_call.1} parent=35 // pred_check_branch
          %136 = sbr.rel (%p134) target = $region40
        $region39: #{tpu_custom_call.1} parent=35 // pred_region
          %s137 = sand.u32 %s46, 1
          %s138 = scalar_lea.sflag [#allocation4], %s137
          %s139 = sand.u32 %s46, 1
          %s140 = smul.addr %s139, 8
          %s141 = scalar_lea.vmem [#allocation5], %s140
          %142 = dma.done %s138, 128
        $region40: #{tpu_custom_call.1} parent=35 // pred_fallthru
          _
      $region36: #{tpu_custom_call.1} parent=5 // pred_fallthru
        _
    $region6: #{tpu_custom_call.1} parent=1 // loop_footer
      %s15 = sadd.s32 1, %s11
    $region7: #{tpu_custom_call.1} parent=1 // loop_footer_branch
      %10 = sbr.rel target = $region3
    $region8: #{tpu_custom_call.1} parent=1 // loop_exit
      _
    %143 = vsyncpa [#allocation3], 1
    %s144 = scalar_lea.sflag [#allocation3], 1
    %145 = vsyncpa %s144, 1
    %146 = vsyncpa [#allocation4], 1
    %s147 = scalar_lea.sflag [#allocation4], 1
    %148 = vsyncpa %s147, 1

// kernel: tpu_custom_call.1
$region0: #{tpu_custom_call.1}
  #allocation0 [shape = 'u32[]', space=smem, size = 0x4, offset = 0x4, fixed_abs, tag = 'smem constant byte address 0x4 - core index']
  #allocation1 [shape = 'u32[144,128]{1,0:T(1,128)}', space=vmem, size = 0x12000, scoped, tag = 'internal scratch']
  %s0 = inlined_call_operand.hbm [shape: bf16[512,256], index: 0, kind: input, shape index: {}]
  %s1 = inlined_call_operand.hbm [shape: bf16[256,128], index: 1, kind: input, shape index: {}]
  %s2 = inlined_call_operand.vmem [shape: f32[1,128], index: 2, kind: input, shape index: {}]
  %s3 = inlined_call_operand.vmem [shape: f32[1,128], index: 3, kind: input, shape index: {}]
  %s4 = inlined_call_operand.hbm [shape: bf16[512,128], index: 4, kind: output, shape index: {}]
  %s5 = sld [smem:[#allocation0]]
  $region57: #{tpu_custom_call.1} parent=0
    _
  %s7 = ssub.s32 1, %s5
  %s8 = scalar_select 0, %s7, %s5
  $region1: #{tpu_custom_call.1} parent=0
    #allocation2 [shape = 'u8[262144]{0}', space=vmem, size = 0x40000, scoped, tag = 'input window, operand 0']
    #allocation3 [shape = 's32[2]{0}', space=sflag, size = 0x8, scoped, tag = 'scoped memory for tpu_custom_call.1']
    #allocation4 [shape = 's32[2]{0}', space=sflag, size = 0x8, scoped, tag = 'scoped memory for tpu_custom_call.1']
    #allocation5 [shape = 'u8[65536]{0}', space=vmem, size = 0x10000, scoped, tag = 'input window, operand 1, single buffered']
    #allocation6 [shape = 's32[1]{0}', space=sflag, size = 0x4, scoped, tag = 'scoped memory for tpu_custom_call.1']
    #allocation7 [shape = 'u8[131072]{0}', space=vmem, size = 0x20000, scoped, tag = 'output window, operand 0']
    %9 = vsyncpa [#allocation3], 0
    %s10 = scalar_lea.sflag [#allocation3], 1
    %11 = vsyncpa %s10, 0
    %12 = vsyncpa [#allocation6], 0
    %13 = vsyncpa [#allocation4], 0
    %s14 = scalar_lea.sflag [#allocation4], 1
    %15 = vsyncpa %s14, 0
    loop: start=0, step=1, limit=4
    $region2: #{tpu_custom_call.1} parent=1 // loop_pre_header
      _
    $region3: #{tpu_custom_call.1} parent=1 // loop_header
      %s17 = sphi 0, %s21
      %p18 = scmp.ge.s32.totalorder %s17, 4
      %s27 = sphi 0, %s29
      %s30 = sphi 0, %s27
      %s31 = sphi 0, %s30
      %s47 = sphi 0, %s31
      %s51 = sphi 0, %s51
      %s53 = sphi 0, %s51
      %s54 = sphi 0, %s53
      %s68 = sphi 0, %s54
      %s72 = sphi 0, %s72
      %s74 = sphi 0, %s72
      %s75 = sphi 0, %s74
      %s89 = sphi 0, %s75
      %s93 = sphi 0, %s93
      %s95 = sphi 0, %s93
      %s96 = sphi 0, %s95
      %s110 = sphi 0, %s96
      %s116 = sphi 0, %s118
      %s119 = sphi 0, %s116
      %s120 = sphi 0, %s119
      %s136 = sphi 0, %s120
    $region4: #{tpu_custom_call.1} parent=1 // loop_header_branch
      %20 = sbr.rel (%p18) target = $region8
    $region5: #{tpu_custom_call.1} parent=1 // loop_body
      %s22 = ssub.s32 %s17, 1
      %s23 = ssub.s32 %s17, 2
      %s24 = sadd.s32 %s17, 1
      %s25 = ssub.s32 %s17, %s24
      %p26 = scmp.eq.s32.totalorder %s25, 0
      %s28 = sadd.s32 %s27, 1
      %s29 = scalar_select %p26, %s27, %s28
      %p32 = pneg %p26
      %p33 = scmp.eq.s32.totalorder %s17, 1
      %p34 = por %p32, %p33
      %p35 = scmp.ne.s32.totalorder %s27, %s30
      %p36 = scmp.eq.s32.totalorder %s17, 0
      %p37 = por %p35, %p36
      %p38 = scmp.ne.s32.totalorder %s27, %s30
      %p39 = scmp.eq.s32.totalorder %s22, 1
      %p40 = por %p38, %p39
      %p41 = scmp.ne.s32.totalorder %s30, %s31
      %p42 = scmp.eq.s32.totalorder %s22, 0
      %p43 = por %p41, %p42
      %p44 = scmp.ne.s32.totalorder %s30, %s31
      %p45 = scmp.eq.s32.totalorder %s23, 1
      %p46 = por %p44, %p45
      %p48 = scmp.ne.s32.totalorder %s31, %s47
      %p49 = scmp.eq.s32.totalorder %s23, 0
      %p50 = por %p48, %p49
      %s52 = sadd.s32 %s51, 1
      %p55 = scmp.eq.s32.totalorder %s17, 1
      %p56 = scmp.ne.s32.totalorder %s51, %s53
      %p57 = scmp.eq.s32.totalorder %s17, 0
      %p58 = por %p56, %p57
      %p59 = scmp.ne.s32.totalorder %s51, %s53
      %p60 = scmp.eq.s32.totalorder %s22, 1
      %p61 = por %p59, %p60
      %p62 = scmp.ne.s32.totalorder %s53, %s54
      %p63 = scmp.eq.s32.totalorder %s22, 0
      %p64 = por %p62, %p63
      %p65 = scmp.ne.s32.totalorder %s53, %s54
      %p66 = scmp.eq.s32.totalorder %s23, 1
      %p67 = por %p65, %p66
      %p69 = scmp.ne.s32.totalorder %s54, %s68
      %p70 = scmp.eq.s32.totalorder %s23, 0
      %p71 = por %p69, %p70
      %s73 = sadd.s32 %s72, 1
      %p76 = scmp.eq.s32.totalorder %s17, 1
      %p77 = scmp.ne.s32.totalorder %s72, %s74
      %p78 = scmp.eq.s32.totalorder %s17, 0
      %p79 = por %p77, %p78
      %p80 = scmp.ne.s32.totalorder %s72, %s74
      %p81 = scmp.eq.s32.totalorder %s22, 1
      %p82 = por %p80, %p81
      %p83 = scmp.ne.s32.totalorder %s74, %s75
      %p84 = scmp.eq.s32.totalorder %s22, 0
      %p85 = por %p83, %p84
      %p86 = scmp.ne.s32.totalorder %s74, %s75
      %p87 = scmp.eq.s32.totalorder %s23, 1
      %p88 = por %p86, %p87
      %p90 = scmp.ne.s32.totalorder %s75, %s89
      %p91 = scmp.eq.s32.totalorder %s23, 0
      %p92 = por %p90, %p91
      %s94 = sadd.s32 %s93, 1
      %p97 = scmp.eq.s32.totalorder %s17, 1
      %p98 = scmp.ne.s32.totalorder %s93, %s95
      %p99 = scmp.eq.s32.totalorder %s17, 0
      %p100 = por %p98, %p99
      %p101 = scmp.ne.s32.totalorder %s93, %s95
      %p102 = scmp.eq.s32.totalorder %s22, 1
      %p103 = por %p101, %p102
      %p104 = scmp.ne.s32.totalorder %s95, %s96
      %p105 = scmp.eq.s32.totalorder %s22, 0
      %p106 = por %p104, %p105
      %p107 = scmp.ne.s32.totalorder %s95, %s96
      %p108 = scmp.eq.s32.totalorder %s23, 1
      %p109 = por %p107, %p108
      %p111 = scmp.ne.s32.totalorder %s96, %s110
      %p112 = scmp.eq.s32.totalorder %s23, 0
      %p113 = por %p111, %p112
      %s114 = ssub.s32 %s17, %s24
      %p115 = scmp.eq.s32.totalorder %s114, 0
      %s117 = sadd.s32 %s116, 1
      %s118 = scalar_select %p115, %s116, %s117
      %p121 = pneg %p115
      %p122 = scmp.eq.s32.totalorder %s17, 1
      %p123 = por %p121, %p122
      %p124 = scmp.ne.s32.totalorder %s116, %s119
      %p125 = scmp.eq.s32.totalorder %s17, 0
      %p126 = por %p124, %p125
      %p127 = scmp.ne.s32.totalorder %s116, %s119
      %p128 = scmp.eq.s32.totalorder %s22, 1
      %p129 = por %p127, %p128
      %p130 = scmp.ne.s32.totalorder %s119, %s120
      %p131 = scmp.eq.s32.totalorder %s22, 0
      %p132 = por %p130, %p131
      %p133 = scmp.ne.s32.totalorder %s119, %s120
      %p134 = scmp.eq.s32.totalorder %s23, 1
      %p135 = por %p133, %p134
      %p137 = scmp.ne.s32.totalorder %s120, %s136
      %p138 = scmp.eq.s32.totalorder %s23, 0
      %p139 = por %p137, %p138
      %p140 = scmp.le.s32.totalorder 1, %s17
      %p141 = scmp.lt.s32.totalorder %s17, 3
      %p142 = pnand %p140, %p141
      %p143 = pneg %p142
      // Predicated region
      $region9: #{tpu_custom_call.1} parent=5 // pred_check
        _
      $region10: #{tpu_custom_call.1} parent=5 // pred_check_branch
        %145 = sbr.rel (%p142) target = $region12
      $region11: #{tpu_custom_call.1} parent=5 // pred_region
        %s146 = ssub.s32 %s17, 1
        // Predicated region
        $region13: #{tpu_custom_call.1} parent=11 // pred_check
          %p147 = pneg %p64
        $region14: #{tpu_custom_call.1} parent=11 // pred_check_branch
          %149 = sbr.rel (%p147) target = $region16
        $region15: #{tpu_custom_call.1} parent=11 // pred_region
          %s151 = ssub.s32 2048, 2048
          %152 = vsyncadd [#allocation6], %s151
          %s153 = sshll.u32 [#allocation5], 4
          %s154 = int_to_ptr.vmem [resolvable:$true] %s153
          %159 = dma.hbm_to_vmem [thread:$0]  %s1, 2048, %s154, [#allocation6], 64, 64, 4
        $region16: #{tpu_custom_call.1} parent=11 // pred_fallthru
          _
        // Predicated region
        $region17: #{tpu_custom_call.1} parent=11 // pred_check
          %p160 = pneg %p85
        $region18: #{tpu_custom_call.1} parent=11 // pred_check_branch
          %162 = sbr.rel (%p160) target = $region20
        $region19: #{tpu_custom_call.1} parent=11 // pred_region
          _
        $region20: #{tpu_custom_call.1} parent=11 // pred_fallthru
          _
        // Predicated region
        $region21: #{tpu_custom_call.1} parent=11 // pred_check
          %p163 = pneg %p106
        $region22: #{tpu_custom_call.1} parent=11 // pred_check_branch
          %165 = sbr.rel (%p163) target = $region24
        $region23: #{tpu_custom_call.1} parent=11 // pred_region
          _
        $region24: #{tpu_custom_call.1} parent=11 // pred_fallthru
          _
      $region12: #{tpu_custom_call.1} parent=5 // pred_fallthru
        _
      %p166 = scmp.lt.s32.totalorder %s17, 2
      // Predicated region
      $region25: #{tpu_custom_call.1} parent=5 // pred_check
        %p167 = pneg %p166
      $region26: #{tpu_custom_call.1} parent=5 // pred_check_branch
        %169 = sbr.rel (%p167) target = $region28
      $region27: #{tpu_custom_call.1} parent=5 // pred_region
        // Predicated region
        $region29: #{tpu_custom_call.1} parent=27 // pred_check
          %p170 = pneg %p37
        $region30: #{tpu_custom_call.1} parent=27 // pred_check_branch
          %172 = sbr.rel (%p170) target = $region32
        $region31: #{tpu_custom_call.1} parent=27 // pred_region
          %s173 = sand.u32 %s27, 1
          %s174 = scalar_lea.sflag [#allocation3], %s173
          %s175 = sand.u32 %s27, 1
          %s176 = smul.addr %s175, 256
          %s177 = scalar_lea.vmem [#allocation2], %s176
          %s178 = smul.u32 32, %s17
          %s180 = ssub.s32 4096, 4096
          %181 = vsyncadd %s174, %s180
          %s182 = smul.addr %s178, 2
          %s183 = smul.addr %s182, 64
          %s184 = scalar_lea.hbm %s0, %s183
          %s185 = sshll.u32 %s177, 4
          %s186 = int_to_ptr.vmem [resolvable:$true] %s185
          %191 = dma.hbm_to_vmem [thread:$0]  %s184, 4096, %s186, %s174, 128, 128, 8
        $region32: #{tpu_custom_call.1} parent=27 // pred_fallthru
          _
      $region28: #{tpu_custom_call.1} parent=5 // pred_fallthru
        _
      %p192 = scmp.le.s32.totalorder 1, %s17
      %p193 = scmp.lt.s32.totalorder %s17, 3
      %p194 = pnand %p192, %p193
      %p195 = pneg %p194
      // Predicated region
      $region33: #{tpu_custom_call.1} parent=5 // pred_check
        _
      $region34: #{tpu_custom_call.1} parent=5 // pred_check_branch
        %197 = sbr.rel (%p194) target = $region36
      $region35: #{tpu_custom_call.1} parent=5 // pred_region
        %s198 = ssub.s32 %s17, 1
        %s199 = sand.u32 %s30, 1
        %s200 = scalar_lea.sflag [#allocation3], %s199
        %s201 = sand.u32 %s30, 1
        %s202 = smul.addr %s201, 256
        %s203 = scalar_lea.vmem [#allocation2], %s202
        // Predicated region
        $region37: #{tpu_custom_call.1} parent=35 // pred_check
          %p204 = pneg %p43
        $region38: #{tpu_custom_call.1} parent=35 // pred_check_branch
          %206 = sbr.rel (%p204) target = $region40
        $region39: #{tpu_custom_call.1} parent=35 // pred_region
          %207 = dma.done %s200, 4096
        $region40: #{tpu_custom_call.1} parent=35 // pred_fallthru
          _
        // Predicated region
        $region41: #{tpu_custom_call.1} parent=35 // pred_check
          %p208 = pneg %p64
        $region42: #{tpu_custom_call.1} parent=35 // pred_check_branch
          %210 = sbr.rel (%p208) target = $region44
        $region43: #{tpu_custom_call.1} parent=35 // pred_region
          %211 = dma.done [#allocation6], 2048
        $region44: #{tpu_custom_call.1} parent=35 // pred_fallthru
          _
        %s212 = sand.u32 %s30, 1
        %s213 = scalar_lea.sflag [#allocation3], %s212
        %s214 = sand.u32 %s30, 1
        %s215 = smul.addr %s214, 256
        %s216 = scalar_lea.vmem [#allocation2], %s215
        %p217 = pneg %p43
        %p218 = pneg %p40
        %p219 = pneg %p64
        %p220 = pneg %p61
        %p221 = pneg %p85
        %p222 = pneg %p82
        %p223 = pneg %p106
        %p224 = pneg %p103
        %p225 = pneg %p132
        %p226 = pneg %p129
        %s227 = sand.u32 %s119, 1
        %s228 = scalar_lea.sflag [#allocation4], %s227
        %s229 = sand.u32 %s119, 1
        %s230 = smul.addr %s229, 128
        %s231 = scalar_lea.vmem [#allocation7], %s230
        %s232 = smul.u32 32, %s22
        %s233 = smul.u32 32, %s22
        %v235 = vld [vmem:[%s203] sm:$0xff]
        %v236 = vld [vmem:[%s203 + $0x8] sm:$0xff]
        %v237 = vld [vmem:[%s203 + $0x10] sm:$0xff]
        %v238 = vld [vmem:[%s203 + $0x18] sm:$0xff]
        %v239 = vld [vmem:[%s203 + $0x20] sm:$0xff]
        %v240 = vld [vmem:[%s203 + $0x28] sm:$0xff]
        %v241 = vld [vmem:[%s203 + $0x30] sm:$0xff]
        %v242 = vld [vmem:[%s203 + $0x38] sm:$0xff]
        %v243 = vld [vmem:[%s203 + $0x40] sm:$0xff]
        %v244 = vld [vmem:[%s203 + $0x48] sm:$0xff]
        %v245 = vld [vmem:[%s203 + $0x50] sm:$0xff]
        %v246 = vld [vmem:[%s203 + $0x58] sm:$0xff]
        %v247 = vld [vmem:[%s203 + $0x60] sm:$0xff]
        %v248 = vld [vmem:[%s203 + $0x68] sm:$0xff]
        %v249 = vld [vmem:[%s203 + $0x70] sm:$0xff]
        %v250 = vld [vmem:[%s203 + $0x78] sm:$0xff]
        %v251 = vld [vmem:[%s203 + $0x80] sm:$0xff]
        %v252 = vld [vmem:[%s203 + $0x88] sm:$0xff]
        %v253 = vld [vmem:[%s203 + $0x90] sm:$0xff]
        %v254 = vld [vmem:[%s203 + $0x98] sm:$0xff]
        %v255 = vld [vmem:[%s203 + $0xa0] sm:$0xff]
        %v256 = vld [vmem:[%s203 + $0xa8] sm:$0xff]
        %v257 = vld [vmem:[%s203 + $0xb0] sm:$0xff]
        %v258 = vld [vmem:[%s203 + $0xb8] sm:$0xff]
        %v259 = vld [vmem:[%s203 + $0xc0] sm:$0xff]
        %v260 = vld [vmem:[%s203 + $0xc8] sm:$0xff]
        %v261 = vld [vmem:[%s203 + $0xd0] sm:$0xff]
        %v262 = vld [vmem:[%s203 + $0xd8] sm:$0xff]
        %v263 = vld [vmem:[%s203 + $0xe0] sm:$0xff]
        %v264 = vld [vmem:[%s203 + $0xe8] sm:$0xff]
        %v265 = vld [vmem:[%s203 + $0xf0] sm:$0xff]
        %v266 = vld [vmem:[%s203 + $0xf8] sm:$0xff]
        %v267 = vld [vmem:[#allocation5] sm:$0xf]
        %v268 = vld [vmem:[#allocation5 + $0x4] sm:$0xf]
        %v269 = vld [vmem:[#allocation5 + $0x8] sm:$0xf]
        %v270 = vld [vmem:[#allocation5 + $0xc] sm:$0xf]
        %v271 = vld [vmem:[#allocation5 + $0x10] sm:$0xf]
        %v272 = vld [vmem:[#allocation5 + $0x14] sm:$0xf]
        %v273 = vld [vmem:[#allocation5 + $0x18] sm:$0xf]
        %v274 = vld [vmem:[#allocation5 + $0x1c] sm:$0xf]
        %v275 = vld [vmem:[#allocation5 + $0x20] sm:$0xf]
        %v276 = vld [vmem:[#allocation5 + $0x24] sm:$0xf]
        %v277 = vld [vmem:[#allocation5 + $0x28] sm:$0xf]
        %v278 = vld [vmem:[#allocation5 + $0x2c] sm:$0xf]
        %v279 = vld [vmem:[#allocation5 + $0x30] sm:$0xf]
        %v280 = vld [vmem:[#allocation5 + $0x34] sm:$0xf]
        %v281 = vld [vmem:[#allocation5 + $0x38] sm:$0xf]
        %v282 = vld [vmem:[#allocation5 + $0x3c] sm:$0xf]
        %v283 = vld [vmem:[#allocation5 + $0x40] sm:$0xf]
        %v284 = vld [vmem:[#allocation5 + $0x44] sm:$0xf]
        %v285 = vld [vmem:[#allocation5 + $0x48] sm:$0xf]
        %v286 = vld [vmem:[#allocation5 + $0x4c] sm:$0xf]
        %v287 = vld [vmem:[#allocation5 + $0x50] sm:$0xf]
        %v288 = vld [vmem:[#allocation5 + $0x54] sm:$0xf]
        %v289 = vld [vmem:[#allocation5 + $0x58] sm:$0xf]
        %v290 = vld [vmem:[#allocation5 + $0x5c] sm:$0xf]
        %v291 = vld [vmem:[#allocation5 + $0x60] sm:$0xf]
        %v292 = vld [vmem:[#allocation5 + $0x64] sm:$0xf]
        %v293 = vld [vmem:[#allocation5 + $0x68] sm:$0xf]
        %v294 = vld [vmem:[#allocation5 + $0x6c] sm:$0xf]
        %v295 = vld [vmem:[#allocation5 + $0x70] sm:$0xf]
        %v296 = vld [vmem:[#allocation5 + $0x74] sm:$0xf]
        %v297 = vld [vmem:[#allocation5 + $0x78] sm:$0xf]
        %v298 = vld [vmem:[#allocation5 + $0x7c] sm:$0xf]
        %v331 = vunpack.c.l.b16 %v235
        %v332 = vunpack.c.h.b16 %v235
        %v333 = vunpack.c.l.b16 %v236
        %v334 = vunpack.c.h.b16 %v236
        %v335 = vunpack.c.l.b16 %v237
        %v336 = vunpack.c.h.b16 %v237
        %v337 = vunpack.c.l.b16 %v238
        %v338 = vunpack.c.h.b16 %v238
        %v339 = vunpack.c.l.b16 %v239
        %v340 = vunpack.c.h.b16 %v239
        %v341 = vunpack.c.l.b16 %v240
        %v342 = vunpack.c.h.b16 %v240
        %v343 = vunpack.c.l.b16 %v241
        %v344 = vunpack.c.h.b16 %v241
        %v345 = vunpack.c.l.b16 %v242
        %v346 = vunpack.c.h.b16 %v242
        %v347 = vunpack.c.l.b16 %v243
        %v348 = vunpack.c.h.b16 %v243
        %v349 = vunpack.c.l.b16 %v244
        %v350 = vunpack.c.h.b16 %v244
        %v351 = vunpack.c.l.b16 %v245
        %v352 = vunpack.c.h.b16 %v245
        %v353 = vunpack.c.l.b16 %v246
        %v354 = vunpack.c.h.b16 %v246
        %v355 = vunpack.c.l.b16 %v247
        %v356 = vunpack.c.h.b16 %v247
        %v357 = vunpack.c.l.b16 %v248
        %v358 = vunpack.c.h.b16 %v248
        %v359 = vunpack.c.l.b16 %v249
        %v360 = vunpack.c.h.b16 %v249
        %v361 = vunpack.c.l.b16 %v250
        %v362 = vunpack.c.h.b16 %v250
        %v363 = vunpack.c.l.b16 %v251
        %v364 = vunpack.c.h.b16 %v251
        %v365 = vunpack.c.l.b16 %v252
        %v366 = vunpack.c.h.b16 %v252
        %v367 = vunpack.c.l.b16 %v253
        %v368 = vunpack.c.h.b16 %v253
        %v369 = vunpack.c.l.b16 %v254
        %v370 = vunpack.c.h.b16 %v254
        %v371 = vunpack.c.l.b16 %v255
        %v372 = vunpack.c.h.b16 %v255
        %v373 = vunpack.c.l.b16 %v256
        %v374 = vunpack.c.h.b16 %v256
        %v375 = vunpack.c.l.b16 %v257
        %v376 = vunpack.c.h.b16 %v257
        %v377 = vunpack.c.l.b16 %v258
        %v378 = vunpack.c.h.b16 %v258
        %v379 = vunpack.c.l.b16 %v259
        %v380 = vunpack.c.h.b16 %v259
        %v381 = vunpack.c.l.b16 %v260
        %v382 = vunpack.c.h.b16 %v260
        %v383 = vunpack.c.l.b16 %v261
        %v384 = vunpack.c.h.b16 %v261
        %v385 = vunpack.c.l.b16 %v262
        %v386 = vunpack.c.h.b16 %v262
        %v387 = vunpack.c.l.b16 %v263
        %v388 = vunpack.c.h.b16 %v263
        %v389 = vunpack.c.l.b16 %v264
        %v390 = vunpack.c.h.b16 %v264
        %v391 = vunpack.c.l.b16 %v265
        %v392 = vunpack.c.h.b16 %v265
        %v393 = vunpack.c.l.b16 %v266
        %v394 = vunpack.c.h.b16 %v266
        %v395 = vpack.c.b16 %v333, %v331
        %v396 = vpack.c.b16 %v334, %v332
        %v397 = vpack.c.b16 %v337, %v335
        %v398 = vpack.c.b16 %v338, %v336
        %v399 = vpack.c.b16 %v341, %v339
        %v400 = vpack.c.b16 %v342, %v340
        %v401 = vpack.c.b16 %v345, %v343
        %v402 = vpack.c.b16 %v346, %v344
        %v403 = vpack.c.b16 %v349, %v347
        %v404 = vpack.c.b16 %v350, %v348
        %v405 = vpack.c.b16 %v353, %v351
        %v406 = vpack.c.b16 %v354, %v352
        %v407 = vpack.c.b16 %v357, %v355
        %v408 = vpack.c.b16 %v358, %v356
        %v409 = vpack.c.b16 %v361, %v359
        %v410 = vpack.c.b16 %v362, %v360
        %v411 = vpack.c.b16 %v365, %v363
        %v412 = vpack.c.b16 %v366, %v364
        %v413 = vpack.c.b16 %v369, %v367
        %v414 = vpack.c.b16 %v370, %v368
        %v415 = vpack.c.b16 %v373, %v371
        %v416 = vpack.c.b16 %v374, %v372
        %v417 = vpack.c.b16 %v377, %v375
        %v418 = vpack.c.b16 %v378, %v376
        %v419 = vpack.c.b16 %v381, %v379
        %v420 = vpack.c.b16 %v382, %v380
        %v421 = vpack.c.b16 %v385, %v383
        %v422 = vpack.c.b16 %v386, %v384
        %v423 = vpack.c.b16 %v389, %v387
        %v424 = vpack.c.b16 %v390, %v388
        %v425 = vpack.c.b16 %v393, %v391
        %v426 = vpack.c.b16 %v394, %v392
        %v491 = vunpack.c.l.b16 %v267
        %v492 = vunpack.c.l.b16 %v268
        %v493 = vunpack.c.l.b16 %v269
        %v494 = vunpack.c.l.b16 %v270
        %v495 = vunpack.c.l.b16 %v271
        %v496 = vunpack.c.l.b16 %v272
        %v497 = vunpack.c.l.b16 %v273
        %v498 = vunpack.c.l.b16 %v274
        %v499 = vunpack.c.l.b16 %v275
        %v500 = vunpack.c.l.b16 %v276
        %v501 = vunpack.c.l.b16 %v277
        %v502 = vunpack.c.l.b16 %v278
        %v503 = vunpack.c.l.b16 %v279
        %v504 = vunpack.c.l.b16 %v280
        %v505 = vunpack.c.l.b16 %v281
        %v506 = vunpack.c.l.b16 %v282
        %v507 = vunpack.c.l.b16 %v283
        %v508 = vunpack.c.l.b16 %v284
        %v509 = vunpack.c.l.b16 %v285
        %v510 = vunpack.c.l.b16 %v286
        %v511 = vunpack.c.l.b16 %v287
        %v512 = vunpack.c.l.b16 %v288
        %v513 = vunpack.c.l.b16 %v289
        %v514 = vunpack.c.l.b16 %v290
        %v515 = vunpack.c.l.b16 %v291
        %v516 = vunpack.c.l.b16 %v292
        %v517 = vunpack.c.l.b16 %v293
        %v518 = vunpack.c.l.b16 %v294
        %v519 = vunpack.c.l.b16 %v295
        %v520 = vunpack.c.l.b16 %v296
        %v521 = vunpack.c.l.b16 %v297
        %v522 = vunpack.c.l.b16 %v298
        %v523 = vpack.c.b16 %v492, %v491
        %v524 = vpack.c.b16 %v494, %v493
        %v525 = vpack.c.b16 %v496, %v495
        %v526 = vpack.c.b16 %v498, %v497
        %v527 = vpack.c.b16 %v500, %v499
        %v528 = vpack.c.b16 %v502, %v501
        %v529 = vpack.c.b16 %v504, %v503
        %v530 = vpack.c.b16 %v506, %v505
        %v531 = vpack.c.b16 %v508, %v507
        %v532 = vpack.c.b16 %v510, %v509
        %v533 = vpack.c.b16 %v512, %v511
        %v534 = vpack.c.b16 %v514, %v513
        %v535 = vpack.c.b16 %v516, %v515
        %v536 = vpack.c.b16 %v518, %v517
        %v537 = vpack.c.b16 %v520, %v519
        %v538 = vpack.c.b16 %v522, %v521
        %555 = vmatprep.subr.bf16.mxu0 0
        %556 = vmatpush1.bf16.msra.mxu0 %v523
        %557 = vmatprep.subr.bf16.mxu0 0
        %558 = vmatpush1.bf16.msra.mxu0 %v524
        %559 = vmatprep.subr.bf16.mxu0 0
        %560 = vmatpush1.bf16.msra.mxu0 %v525
        %561 = vmatprep.subr.bf16.mxu0 0
        %562 = vmatpush1.bf16.msra.mxu0 %v526
        %563 = vmatprep.subr.bf16.mxu0 0
        %564 = vmatpush1.bf16.msra.mxu0 %v527
        %565 = vmatprep.subr.bf16.mxu0 0
        %566 = vmatpush1.bf16.msra.mxu0 %v528
        %567 = vmatprep.subr.bf16.mxu0 0
        %568 = vmatpush1.bf16.msra.mxu0 %v529
        %569 = vmatprep.subr.bf16.mxu0 0
        %570 = vmatpush1.bf16.msra.mxu0 %v530
        %571 = vmatprep.subr.bf16.mxu0 0
        %572 = vmatpush1.bf16.msra.mxu0 %v531
        %573 = vmatprep.subr.bf16.mxu0 0
        %574 = vmatpush1.bf16.msra.mxu0 %v532
        %575 = vmatprep.subr.bf16.mxu0 0
        %576 = vmatpush1.bf16.msra.mxu0 %v533
        %577 = vmatprep.subr.bf16.mxu0 0
        %578 = vmatpush1.bf16.msra.mxu0 %v534
        %579 = vmatprep.subr.bf16.mxu0 0
        %580 = vmatpush1.bf16.msra.mxu0 %v535
        %581 = vmatprep.subr.bf16.mxu0 0
        %582 = vmatpush1.bf16.msra.mxu0 %v536
        %583 = vmatprep.subr.bf16.mxu0 0
        %584 = vmatpush1.bf16.msra.mxu0 %v537
        %585 = vmatprep.subr.bf16.mxu0 0
        %586 = vmatpush1.bf16.msra.mxu0 %v538
        %587 = vmatprep.mubr.bf16.mxu0 %v396
        %588 = vmatmul.mubr.bf16.gmra.mrb[0].mxu0 %v395
        %v589 = vpop.f32.mrb[0].mxu0
        %v590 = vadd.f32 0.0, %v589
        %v591 = vpop.f32.mrb[0].mxu0
        %v592 = vpop.f32.mrb[0].mxu0
        %v593 = vadd.f32 0.0, %v592
        %v594 = vpop.f32.mrb[0].mxu0
        %595 = vmatprep.mubr.bf16.mxu0 %v398
        %596 = vmatmul.mubr.bf16.gmra.mrb[0].mxu0 %v397
        %v597 = vpop.f32.mrb[0].mxu0
        %v598 = vadd.f32 0.0, %v597
        %v599 = vpop.f32.mrb[0].mxu0
        %v600 = vpop.f32.mrb[0].mxu0
        %v601 = vadd.f32 0.0, %v600
        %v602 = vpop.f32.mrb[0].mxu0
        %603 = vmatprep.mubr.bf16.mxu0 %v400
        %604 = vmatmul.mubr.bf16.gmra.mrb[0].mxu0 %v399
        %v605 = vpop.f32.mrb[0].mxu0
        %v606 = vadd.f32 0.0, %v605
        %v607 = vpop.f32.mrb[0].mxu0
        %v608 = vpop.f32.mrb[0].mxu0
        %v609 = vadd.f32 0.0, %v608
        %v610 = vpop.f32.mrb[0].mxu0
        %611 = vmatprep.mubr.bf16.mxu0 %v402
        %612 = vmatmul.mubr.bf16.gmra.mrb[0].mxu0 %v401
        %v613 = vpop.f32.mrb[0].mxu0
        %v614 = vadd.f32 0.0, %v613
        %v615 = vpop.f32.mrb[0].mxu0
        %v616 = vpop.f32.mrb[0].mxu0
        %v617 = vadd.f32 0.0, %v616
        %v618 = vpop.f32.mrb[0].mxu0
        %619 = vmatprep.mubr.bf16.mxu0 %v404
        %620 = vmatmul.mubr.bf16.gmra.mrb[0].mxu0 %v403
        %v621 = vpop.f32.mrb[0].mxu0
        %v622 = vadd.f32 0.0, %v621
        %v623 = vpop.f32.mrb[0].mxu0
        %v624 = vpop.f32.mrb[0].mxu0
        %v625 = vadd.f32 0.0, %v624
        %v626 = vpop.f32.mrb[0].mxu0
        %627 = vmatprep.mubr.bf16.mxu0 %v406
        %628 = vmatmul.mubr.bf16.gmra.mrb[0].mxu0 %v405
        %v629 = vpop.f32.mrb[0].mxu0
        %v630 = vadd.f32 0.0, %v629
        %v631 = vpop.f32.mrb[0].mxu0
        %v632 = vpop.f32.mrb[0].mxu0
        %v633 = vadd.f32 0.0, %v632
        %v634 = vpop.f32.mrb[0].mxu0
        %635 = vmatprep.mubr.bf16.mxu0 %v408
        %636 = vmatmul.mubr.bf16.gmra.mrb[0].mxu0 %v407
        %v637 = vpop.f32.mrb[0].mxu0
        %v638 = vadd.f32 0.0, %v637
        %v639 = vpop.f32.mrb[0].mxu0
        %v640 = vpop.f32.mrb[0].mxu0
        %v641 = vadd.f32 0.0, %v640
        %v642 = vpop.f32.mrb[0].mxu0
        %643 = vmatprep.mubr.bf16.mxu0 %v410
        %644 = vmatmul.mubr.bf16.gmra.mrb[0].mxu0 %v409
        %v645 = vpop.f32.mrb[0].mxu0
        %v646 = vadd.f32 0.0, %v645
        %v647 = vpop.f32.mrb[0].mxu0
        %v648 = vpop.f32.mrb[0].mxu0
        %v649 = vadd.f32 0.0, %v648
        %v650 = vpop.f32.mrb[0].mxu0
        %651 = vmatprep.mubr.bf16.mxu0 %v412
        %652 = vmatmul.mubr.bf16.gmra.mrb[0].mxu0 %v411
        %v653 = vpop.f32.mrb[0].mxu0
        %v654 = vadd.f32 0.0, %v653
        %v655 = vpop.f32.mrb[0].mxu0
        %v656 = vpop.f32.mrb[0].mxu0
        %v657 = vadd.f32 0.0, %v656
        %v658 = vpop.f32.mrb[0].mxu0
        %659 = vmatprep.mubr.bf16.mxu0 %v414
        %660 = vmatmul.mubr.bf16.gmra.mrb[0].mxu0 %v413
        %v661 = vpop.f32.mrb[0].mxu0
        %v662 = vadd.f32 0.0, %v661
        %v663 = vpop.f32.mrb[0].mxu0
        %v664 = vpop.f32.mrb[0].mxu0
        %v665 = vadd.f32 0.0, %v664
        %v666 = vpop.f32.mrb[0].mxu0
        %667 = vmatprep.mubr.bf16.mxu0 %v416
        %668 = vmatmul.mubr.bf16.gmra.mrb[0].mxu0 %v415
        %v669 = vpop.f32.mrb[0].mxu0
        %v670 = vadd.f32 0.0, %v669
        %v671 = vpop.f32.mrb[0].mxu0
        %v672 = vpop.f32.mrb[0].mxu0
        %v673 = vadd.f32 0.0, %v672
        %v674 = vpop.f32.mrb[0].mxu0
        %675 = vmatprep.mubr.bf16.mxu0 %v418
        %676 = vmatmul.mubr.bf16.gmra.mrb[0].mxu0 %v417
        %v677 = vpop.f32.mrb[0].mxu0
        %v678 = vadd.f32 0.0, %v677
        %v679 = vpop.f32.mrb[0].mxu0
        %v680 = vpop.f32.mrb[0].mxu0
        %v681 = vadd.f32 0.0, %v680
        %v682 = vpop.f32.mrb[0].mxu0
        %683 = vmatprep.mubr.bf16.mxu0 %v420
        %684 = vmatmul.mubr.bf16.gmra.mrb[0].mxu0 %v419
        %v685 = vpop.f32.mrb[0].mxu0
        %v686 = vadd.f32 0.0, %v685
        %v687 = vpop.f32.mrb[0].mxu0
        %v688 = vpop.f32.mrb[0].mxu0
        %v689 = vadd.f32 0.0, %v688
        %v690 = vpop.f32.mrb[0].mxu0
        %691 = vmatprep.mubr.bf16.mxu0 %v422
        %692 = vmatmul.mubr.bf16.gmra.mrb[0].mxu0 %v421
        %v693 = vpop.f32.mrb[0].mxu0
        %v694 = vadd.f32 0.0, %v693
        %v695 = vpop.f32.mrb[0].mxu0
        %v696 = vpop.f32.mrb[0].mxu0
        %v697 = vadd.f32 0.0, %v696
        %v698 = vpop.f32.mrb[0].mxu0
        %699 = vmatprep.mubr.bf16.mxu0 %v424
        %700 = vmatmul.mubr.bf16.gmra.mrb[0].mxu0 %v423
        %v701 = vpop.f32.mrb[0].mxu0
        %v702 = vadd.f32 0.0, %v701
        %v703 = vpop.f32.mrb[0].mxu0
        %v704 = vpop.f32.mrb[0].mxu0
        %v705 = vadd.f32 0.0, %v704
        %v706 = vpop.f32.mrb[0].mxu0
        %707 = vmatprep.mubr.bf16.mxu0 %v426
        %708 = vmatmul.mubr.bf16.gmra.mrb[0].mxu0 %v425
        %v709 = vpop.f32.mrb[0].mxu0
        %v710 = vadd.f32 0.0, %v709
        %v711 = vpop.f32.mrb[0].mxu0
        %v712 = vpop.f32.mrb[0].mxu0
        %v713 = vadd.f32 0.0, %v712
        %v714 = vpop.f32.mrb[0].mxu0
        %715 = vdwg.mxu0
        %v716 = vld [vmem:[%s2] sm:$0x1]
        %v718 = vlaneseq
        %v719 = vshrl.u32 %v718, 7
        %v720 = vsub.s32 0, %v719
        %v721 = vrot.slane %v716, %v720
        %v723 = vmul.f32 %v590, %v721
        %v724 = vmul.f32 %v593, %v721
        %v725 = vmul.f32 %v598, %v721
        %v726 = vmul.f32 %v601, %v721
        %v727 = vmul.f32 %v606, %v721
        %v728 = vmul.f32 %v609, %v721
        %v729 = vmul.f32 %v614, %v721
        %v730 = vmul.f32 %v617, %v721
        %v731 = vmul.f32 %v622, %v721
        %v732 = vmul.f32 %v625, %v721
        %v733 = vmul.f32 %v630, %v721
        %v734 = vmul.f32 %v633, %v721
        %v735 = vmul.f32 %v638, %v721
        %v736 = vmul.f32 %v641, %v721
        %v737 = vmul.f32 %v646, %v721
        %v738 = vmul.f32 %v649, %v721
        %v739 = vmul.f32 %v654, %v721
        %v740 = vmul.f32 %v657, %v721
        %v741 = vmul.f32 %v662, %v721
        %v742 = vmul.f32 %v665, %v721
        %v743 = vmul.f32 %v670, %v721
        %v744 = vmul.f32 %v673, %v721
        %v745 = vmul.f32 %v678, %v721
        %v746 = vmul.f32 %v681, %v721
        %v747 = vmul.f32 %v686, %v721
        %v748 = vmul.f32 %v689, %v721
        %v749 = vmul.f32 %v694, %v721
        %v750 = vmul.f32 %v697, %v721
        %v751 = vmul.f32 %v702, %v721
        %v752 = vmul.f32 %v705, %v721
        %v753 = vmul.f32 %v710, %v721
        %v754 = vmul.f32 %v713, %v721
        %v755 = vld [vmem:[%s3] sm:$0x1]
        %v757 = vlaneseq
        %v758 = vshrl.u32 %v757, 7
        %v759 = vsub.s32 0, %v758
        %v760 = vrot.slane %v755, %v759
        %v762 = vadd.f32 %v723, %v760
        %v763 = vadd.f32 %v724, %v760
        %v764 = vadd.f32 %v725, %v760
        %v765 = vadd.f32 %v726, %v760
        %v766 = vadd.f32 %v727, %v760
        %v767 = vadd.f32 %v728, %v760
        %v768 = vadd.f32 %v729, %v760
        %v769 = vadd.f32 %v730, %v760
        %v770 = vadd.f32 %v731, %v760
        %v771 = vadd.f32 %v732, %v760
        %v772 = vadd.f32 %v733, %v760
        %v773 = vadd.f32 %v734, %v760
        %v774 = vadd.f32 %v735, %v760
        %v775 = vadd.f32 %v736, %v760
        %v776 = vadd.f32 %v737, %v760
        %v777 = vadd.f32 %v738, %v760
        %v778 = vadd.f32 %v739, %v760
        %v779 = vadd.f32 %v740, %v760
        %v780 = vadd.f32 %v741, %v760
        %v781 = vadd.f32 %v742, %v760
        %v782 = vadd.f32 %v743, %v760
        %v783 = vadd.f32 %v744, %v760
        %v784 = vadd.f32 %v745, %v760
        %v785 = vadd.f32 %v746, %v760
        %v786 = vadd.f32 %v747, %v760
        %v787 = vadd.f32 %v748, %v760
        %v788 = vadd.f32 %v749, %v760
        %v789 = vadd.f32 %v750, %v760
        %v790 = vadd.f32 %v751, %v760
        %v791 = vadd.f32 %v752, %v760
        %v792 = vadd.f32 %v753, %v760
        %v793 = vadd.f32 %v754, %v760
        %v794 = vmax.f32 %v762, 0.0
        %v795 = vmax.f32 %v763, 0.0
        %v796 = vmax.f32 %v764, 0.0
        %v797 = vmax.f32 %v765, 0.0
        %v798 = vmax.f32 %v766, 0.0
        %v799 = vmax.f32 %v767, 0.0
        %v800 = vmax.f32 %v768, 0.0
        %v801 = vmax.f32 %v769, 0.0
        %v802 = vmax.f32 %v770, 0.0
        %v803 = vmax.f32 %v771, 0.0
        %v804 = vmax.f32 %v772, 0.0
        %v805 = vmax.f32 %v773, 0.0
        %v806 = vmax.f32 %v774, 0.0
        %v807 = vmax.f32 %v775, 0.0
        %v808 = vmax.f32 %v776, 0.0
        %v809 = vmax.f32 %v777, 0.0
        %v810 = vmax.f32 %v778, 0.0
        %v811 = vmax.f32 %v779, 0.0
        %v812 = vmax.f32 %v780, 0.0
        %v813 = vmax.f32 %v781, 0.0
        %v814 = vmax.f32 %v782, 0.0
        %v815 = vmax.f32 %v783, 0.0
        %v816 = vmax.f32 %v784, 0.0
        %v817 = vmax.f32 %v785, 0.0
        %v818 = vmax.f32 %v786, 0.0
        %v819 = vmax.f32 %v787, 0.0
        %v820 = vmax.f32 %v788, 0.0
        %v821 = vmax.f32 %v789, 0.0
        %v822 = vmax.f32 %v790, 0.0
        %v823 = vmax.f32 %v791, 0.0
        %v824 = vmax.f32 %v792, 0.0
        %v825 = vmax.f32 %v793, 0.0
        %v826 = vpack.c.bf16 %v795, %v794
        %v827 = vpack.c.bf16 %v797, %v796
        %v828 = vpack.c.bf16 %v799, %v798
        %v829 = vpack.c.bf16 %v801, %v800
        %v830 = vpack.c.bf16 %v803, %v802
        %v831 = vpack.c.bf16 %v805, %v804
        %v832 = vpack.c.bf16 %v807, %v806
        %v833 = vpack.c.bf16 %v809, %v808
        %v834 = vpack.c.bf16 %v811, %v810
        %v835 = vpack.c.bf16 %v813, %v812
        %v836 = vpack.c.bf16 %v815, %v814
        %v837 = vpack.c.bf16 %v817, %v816
        %v838 = vpack.c.bf16 %v819, %v818
        %v839 = vpack.c.bf16 %v821, %v820
        %v840 = vpack.c.bf16 %v823, %v822
        %v841 = vpack.c.bf16 %v825, %v824
        %v858 = vunpack.c.l.b16 %v826
        %v859 = vunpack.c.h.b16 %v826
        %v860 = vunpack.c.l.b16 %v827
        %v861 = vunpack.c.h.b16 %v827
        %v862 = vunpack.c.l.b16 %v828
        %v863 = vunpack.c.h.b16 %v828
        %v864 = vunpack.c.l.b16 %v829
        %v865 = vunpack.c.h.b16 %v829
        %v866 = vunpack.c.l.b16 %v830
        %v867 = vunpack.c.h.b16 %v830
        %v868 = vunpack.c.l.b16 %v831
        %v869 = vunpack.c.h.b16 %v831
        %v870 = vunpack.c.l.b16 %v832
        %v871 = vunpack.c.h.b16 %v832
        %v872 = vunpack.c.l.b16 %v833
        %v873 = vunpack.c.h.b16 %v833
        %v874 = vunpack.c.l.b16 %v834
        %v875 = vunpack.c.h.b16 %v834
        %v876 = vunpack.c.l.b16 %v835
        %v877 = vunpack.c.h.b16 %v835
        %v878 = vunpack.c.l.b16 %v836
        %v879 = vunpack.c.h.b16 %v836
        %v880 = vunpack.c.l.b16 %v837
        %v881 = vunpack.c.h.b16 %v837
        %v882 = vunpack.c.l.b16 %v838
        %v883 = vunpack.c.h.b16 %v838
        %v884 = vunpack.c.l.b16 %v839
        %v885 = vunpack.c.h.b16 %v839
        %v886 = vunpack.c.l.b16 %v840
        %v887 = vunpack.c.h.b16 %v840
        %v888 = vunpack.c.l.b16 %v841
        %v889 = vunpack.c.h.b16 %v841
        %v890 = vpack.c.b16 %v858, %v858
        %v891 = vpack.c.b16 %v859, %v859
        %v892 = vpack.c.b16 %v860, %v860
        %v893 = vpack.c.b16 %v861, %v861
        %v894 = vpack.c.b16 %v862, %v862
        %v895 = vpack.c.b16 %v863, %v863
        %v896 = vpack.c.b16 %v864, %v864
        %v897 = vpack.c.b16 %v865, %v865
        %v898 = vpack.c.b16 %v866, %v866
        %v899 = vpack.c.b16 %v867, %v867
        %v900 = vpack.c.b16 %v868, %v868
        %v901 = vpack.c.b16 %v869, %v869
        %v902 = vpack.c.b16 %v870, %v870
        %v903 = vpack.c.b16 %v871, %v871
        %v904 = vpack.c.b16 %v872, %v872
        %v905 = vpack.c.b16 %v873, %v873
        %v906 = vpack.c.b16 %v874, %v874
        %v907 = vpack.c.b16 %v875, %v875
        %v908 = vpack.c.b16 %v876, %v876
        %v909 = vpack.c.b16 %v877, %v877
        %v910 = vpack.c.b16 %v878, %v878
        %v911 = vpack.c.b16 %v879, %v879
        %v912 = vpack.c.b16 %v880, %v880
        %v913 = vpack.c.b16 %v881, %v881
        %v914 = vpack.c.b16 %v882, %v882
        %v915 = vpack.c.b16 %v883, %v883
        %v916 = vpack.c.b16 %v884, %v884
        %v917 = vpack.c.b16 %v885, %v885
        %v918 = vpack.c.b16 %v886, %v886
        %v919 = vpack.c.b16 %v887, %v887
        %v920 = vpack.c.b16 %v888, %v888
        %v921 = vpack.c.b16 %v889, %v889
        %954 = vst [vmem:[%s231] sm:$0xf] %v890
        %955 = vst [vmem:[%s231 + $0x4] sm:$0xf] %v891
        %956 = vst [vmem:[%s231 + $0x8] sm:$0xf] %v892
        %957 = vst [vmem:[%s231 + $0xc] sm:$0xf] %v893
        %958 = vst [vmem:[%s231 + $0x10] sm:$0xf] %v894
        %959 = vst [vmem:[%s231 + $0x14] sm:$0xf] %v895
        %960 = vst [vmem:[%s231 + $0x18] sm:$0xf] %v896
        %961 = vst [vmem:[%s231 + $0x1c] sm:$0xf] %v897
        %962 = vst [vmem:[%s231 + $0x20] sm:$0xf] %v898
        %963 = vst [vmem:[%s231 + $0x24] sm:$0xf] %v899
        %964 = vst [vmem:[%s231 + $0x28] sm:$0xf] %v900
        %965 = vst [vmem:[%s231 + $0x2c] sm:$0xf] %v901
        %966 = vst [vmem:[%s231 + $0x30] sm:$0xf] %v902
        %967 = vst [vmem:[%s231 + $0x34] sm:$0xf] %v903
        %968 = vst [vmem:[%s231 + $0x38] sm:$0xf] %v904
        %969 = vst [vmem:[%s231 + $0x3c] sm:$0xf] %v905
        %970 = vst [vmem:[%s231 + $0x40] sm:$0xf] %v906
        %971 = vst [vmem:[%s231 + $0x44] sm:$0xf] %v907
        %972 = vst [vmem:[%s231 + $0x48] sm:$0xf] %v908
        %973 = vst [vmem:[%s231 + $0x4c] sm:$0xf] %v909
        %974 = vst [vmem:[%s231 + $0x50] sm:$0xf] %v910
        %975 = vst [vmem:[%s231 + $0x54] sm:$0xf] %v911
        %976 = vst [vmem:[%s231 + $0x58] sm:$0xf] %v912
        %977 = vst [vmem:[%s231 + $0x5c] sm:$0xf] %v913
        %978 = vst [vmem:[%s231 + $0x60] sm:$0xf] %v914
        %979 = vst [vmem:[%s231 + $0x64] sm:$0xf] %v915
        %980 = vst [vmem:[%s231 + $0x68] sm:$0xf] %v916
        %981 = vst [vmem:[%s231 + $0x6c] sm:$0xf] %v917
        %982 = vst [vmem:[%s231 + $0x70] sm:$0xf] %v918
        %983 = vst [vmem:[%s231 + $0x74] sm:$0xf] %v919
        %984 = vst [vmem:[%s231 + $0x78] sm:$0xf] %v920
        %985 = vst [vmem:[%s231 + $0x7c] sm:$0xf] %v921
        %s986 = sand.u32 %s119, 1
        %s987 = scalar_lea.sflag [#allocation4], %s986
        %s988 = sand.u32 %s119, 1
        %s989 = smul.addr %s988, 128
        %s990 = scalar_lea.vmem [#allocation7], %s989
        // Predicated region
        $region45: #{tpu_custom_call.1} parent=35 // pred_check
          %p991 = pneg %p129
        $region46: #{tpu_custom_call.1} parent=35 // pred_check_branch
          %993 = sbr.rel (%p991) target = $region48
        $region47: #{tpu_custom_call.1} parent=35 // pred_region
          %s994 = smul.u32 32, %s22
          %s996 = ssub.s32 2048, 2048
          %997 = vsyncadd %s987, %s996
          %s998 = smul.addr %s994, 64
          %s999 = scalar_lea.hbm %s4, %s998
          %s1000 = sshll.u32 %s990, 4
          %s1001 = int_to_ptr.vmem [resolvable:$true] %s1000
          %1006 = dma.vmem_to_hbm [thread:$0]  %s1001, 2048, %s999, %s987, 64, 64, 4
        $region48: #{tpu_custom_call.1} parent=35 // pred_fallthru
          _
      $region36: #{tpu_custom_call.1} parent=5 // pred_fallthru
        _
      %p1007 = scmp.le.s32.totalorder 2, %s17
      // Predicated region
      $region49: #{tpu_custom_call.1} parent=5 // pred_check
        %p1008 = pneg %p1007
      $region50: #{tpu_custom_call.1} parent=5 // pred_check_branch
        %1010 = sbr.rel (%p1008) target = $region52
      $region51: #{tpu_custom_call.1} parent=5 // pred_region
        %s1011 = ssub.s32 %s17, 2
        // Predicated region
        $region53: #{tpu_custom_call.1} parent=51 // pred_check
          %p1012 = pneg %p135
        $region54: #{tpu_custom_call.1} parent=51 // pred_check_branch
          %1014 = sbr.rel (%p1012) target = $region56
        $region55: #{tpu_custom_call.1} parent=51 // pred_region
          %s1015 = sand.u32 %s120, 1
          %s1016 = scalar_lea.sflag [#allocation4], %s1015
          %s1017 = sand.u32 %s120, 1
          %s1018 = smul.addr %s1017, 128
          %s1019 = scalar_lea.vmem [#allocation7], %s1018
          %1020 = dma.done %s1016, 2048
        $region56: #{tpu_custom_call.1} parent=51 // pred_fallthru
          _
      $region52: #{tpu_custom_call.1} parent=5 // pred_fallthru
        _
    $region6: #{tpu_custom_call.1} parent=1 // loop_footer
      %s21 = sadd.s32 1, %s17
    $region7: #{tpu_custom_call.1} parent=1 // loop_footer_branch
      %16 = sbr.rel target = $region3
    $region8: #{tpu_custom_call.1} parent=1 // loop_exit
      _
    %1021 = vsyncpa [#allocation3], 1
    %s1022 = scalar_lea.sflag [#allocation3], 1
    %1023 = vsyncpa %s1022, 1
    %1024 = vsyncpa [#allocation6], 1
    %1025 = vsyncpa [#allocation4], 1
    %s1026 = scalar_lea.sflag [#allocation4], 1
    %1027 = vsyncpa %s1026, 1

</llo_original>
